<compile_context>
chip_gen: v7x
topology: tpu7x:2x2x1
jax: 0.10.0
libtpu: 0.0.40
codegen_flags: <defaults>
</compile_context>

<pallas_src>
import functools

import jax
import jax.numpy as jnp
from jax.experimental import pallas as pl
from jax.experimental.pallas import tpu as pltpu


def _round_up(x, m):
    return (x + m - 1) // m * m


# ----------------------------------------------------------------------------
# Kernel: fused actor+critic MLP on packed (P, P) weights.
# ----------------------------------------------------------------------------
def actor_critic_kernel(obs_ref, w_ref, b_ref, out_ref):
    # obs_ref : (tm, obs_dim) f32   raw observations (no lane padding in HBM)
    # w_ref   : (3, P, P)     bf16/f32 packed weights (see header comment)
    # b_ref   : (8, P)        f32, rows 0/1/2 hold the packed biases (rest zero)
    # out_ref : (tm, P)       f32, lanes [0:A] = action mean, lane A = value
    cdt = w_ref.dtype                      # matmul operand dtype (bf16 or f32)
    x = obs_ref[...].astype(cdt)           # (tm, obs_dim)
    tm, k = x.shape
    P = w_ref.shape[-1]
    if k < P:
        # Lane-pad obs to P inside VMEM (cheap).  Padded lanes hit zero weights and
        # zero biases, so padding stays exactly 0 through tanh.
        x = jnp.concatenate([x, jnp.zeros((tm, P - k), cdt)], axis=-1)

    # layer 1: [w1a | w1c] packed along output lanes (f32 accumulation)
    h = jnp.tanh(
        jnp.dot(x, w_ref[0], preferred_element_type=jnp.float32) + b_ref[0:1, :]
    )
    # layer 2: blockdiag(w2a, w2c)
    h = jnp.tanh(
        jnp.dot(h.astype(cdt), w_ref[1], preferred_element_type=jnp.float32)
        + b_ref[1:2, :]
    )
    # heads: blockdiag(wm, wv) -> lane-dense output slab
    out_ref[...] = (
        jnp.dot(h.astype(cdt), w_ref[2], preferred_element_type=jnp.float32)
        + b_ref[2:3, :]
    )


# ----------------------------------------------------------------------------
# Parameter packing (done ONCE in make_actor_critic_forward, not per call).
# ----------------------------------------------------------------------------
def pack_params(params, obs_dim, action_dim, hidden_dims, compute_dtype=jnp.bfloat16):
    h1, h2 = hidden_dims
    P = _round_up(max(obs_dim, 2 * h1, 2 * h2, action_dim + 1), 128)

    w = jnp.zeros((3, P, P), jnp.float32)
    # layer 1: columns [0:h1] actor, [h1:2h1] critic
    w = w.at[0, :obs_dim, :h1].set(params["w1a"])
    w = w.at[0, :obs_dim, h1:2 * h1].set(params["w1c"])
    # layer 2: block diagonal
    w = w.at[1, :h1, :h2].set(params["w2a"])
    w = w.at[1, h1:2 * h1, h2:2 * h2].set(params["w2c"])
    # heads: block diagonal -> lanes [0:A] mean, lane A value
    w = w.at[2, :h2, :action_dim].set(params["wm"])
    w = w.at[2, h2:2 * h2, action_dim:action_dim + 1].set(params["wv"])

    b = jnp.zeros((8, P), jnp.float32)
    b = b.at[0, :h1].set(params["b1a"][0])
    b = b.at[0, h1:2 * h1].set(params["b1c"][0])
    b = b.at[1, :h2].set(params["b2a"][0])
    b = b.at[1, h2:2 * h2].set(params["b2c"][0])
    b = b.at[2, :action_dim].set(params["bm"][0])
    b = b.at[2, action_dim].set(params["bv"][0, 0])

    # Biases stay f32 (added post-accumulation); only matmul operands are cast.
    return w.astype(compute_dtype), b, P


# ----------------------------------------------------------------------------
# Batch-tile selection: divisor-aware, <= 512 rows per step, >= 2 steps when
# B_pad > 8 so v7x megacore can split the "parallel" grid axis across both TCs.
# ----------------------------------------------------------------------------
def _choose_batch_tile(B):
    B8 = _round_up(max(B, 1), 8)
    if B8 <= 8:
        return B8, B8                      # single tiny tile; nothing to split
    max_tile = 512
    n_steps = max(2, -(-B8 // max_tile))   # >= 2 grid steps, tiles capped at 512
    tm = _round_up(-(-B8 // n_steps), 8)   # divisor-aware: minimize dead rows
    return tm, n_steps * tm


# ----------------------------------------------------------------------------
# Jitted forward on pre-packed slabs (pad + pallas_call + slices fuse into one
# XLA program).  action_dim is static (needed for the output slice).
# ----------------------------------------------------------------------------
@functools.partial(jax.jit, static_argnames=("action_dim",))
def _forward_packed(obs, w_slab, b_slab, std, *, action_dim):
    B, obs_dim = obs.shape
    P = w_slab.shape[-1]

    tm, B_pad = _choose_batch_tile(B)
    obs_p = obs if B_pad == B else jnp.pad(obs, ((0, B_pad - B), (0, 0)))
    grid = (B_pad // tm,)

    # Advisory cost hint (counts padded-lane FLOPs; harmless to the scheduler).
    flops = 2 * B_pad * P * P * 3
    transcendentals = 2 * B_pad * P
    bytes_accessed = (
        obs_p.size * obs_p.dtype.itemsize
        + w_slab.size * w_slab.dtype.itemsize
        + b_slab.size * b_slab.dtype.itemsize
        + B_pad * P * 4
    )

    out = pl.pallas_call(
        actor_critic_kernel,
        out_shape=jax.ShapeDtypeStruct((B_pad, P), jnp.float32),
        grid=grid,
        in_specs=[
            # obs: batch-tiled, NOT lane-padded (last dim == full array dim is legal)
            pl.BlockSpec((tm, obs_dim), lambda i: (i, 0)),
            # weight slab: resident across the grid (constant block index)
            pl.BlockSpec((3, P, P), lambda i: (0, 0, 0)),
            # bias slab: resident across the grid
            pl.BlockSpec((8, P), lambda i: (0, 0)),
        ],
        out_specs=pl.BlockSpec((tm, P), lambda i: (i, 0)),  # lane-dense output slab
        compiler_params=pltpu.CompilerParams(
            dimension_semantics=("parallel",),               # megacore batch split
        ),
        cost_estimate=pl.CostEstimate(
            flops=flops,
            transcendentals=transcendentals,
            bytes_accessed=bytes_accessed,
        ),
    )(obs_p, w_slab, b_slab)

    mean = out[:B, :action_dim]
    value = out[:B, action_dim:action_dim + 1]
    return mean, std, value


# ----------------------------------------------------------------------------
# Factory: pack params once, hoist exp(log_std), return a jitted forward(obs).
# ----------------------------------------------------------------------------
def make_actor_critic_forward(params, obs_dim, action_dim, hidden_dims=(32, 32),
                              compute_dtype=jnp.bfloat16):
    """Returns forward(obs) -> (action_mean (B,A), action_std (1,A), value (B,1)).

    compute_dtype=jnp.bfloat16: bf16 MXU operands / f32 accumulation (v6e, v7x).
    compute_dtype=jnp.float32 : exact f32 path (v5e fallback / tight numerics).
    The Normal distribution is represented by its sufficient statistics (mean, std);
    sampling / log_prob / entropy are plain-JAX ops on those.
    """
    w_slab, b_slab, _ = pack_params(params, obs_dim, action_dim, hidden_dims,
                                    compute_dtype)
    std = jnp.exp(params["log_std"])       # obs-independent -> computed once here

    def forward(obs):
        return _forward_packed(obs, w_slab, b_slab, std, action_dim=action_dim)

    return forward


# ----------------------------------------------------------------------------
# Init + pure-JAX reference (for the correctness check)
# ----------------------------------------------------------------------------
def init_params(key, obs_dim, action_dim, hidden_dims=(32, 32)):
    """Deterministic init mimicking PyTorch Linear default (U(-1/sqrt(fan_in), ...))."""
    h1, h2 = hidden_dims

    def linear(key, fan_in, fan_out):
        kw, kb = jax.random.split(key)
        bound = 1.0 / jnp.sqrt(fan_in)
        w = jax.random.uniform(kw, (fan_in, fan_out), jnp.float32, -bound, bound)
        b = jax.random.uniform(kb, (1, fan_out), jnp.float32, -bound, bound)
        return w, b

    keys = jax.random.split(key, 6)
    w1a, b1a = linear(keys[0], obs_dim, h1)
    w2a, b2a = linear(keys[1], h1, h2)
    wm, bm = linear(keys[2], h2, action_dim)
    w1c, b1c = linear(keys[3], obs_dim, h1)
    w2c, b2c = linear(keys[4], h1, h2)
    wv, bv = linear(keys[5], h2, 1)
    log_std = jnp.zeros((1, action_dim), jnp.float32)  # nn.Parameter(torch.zeros(1, A))

    return dict(
        w1a=w1a, b1a=b1a, w2a=w2a, b2a=b2a, wm=wm, bm=bm, log_std=log_std,
        w1c=w1c, b1c=b1c, w2c=w2c, b2c=b2c, wv=wv, bv=bv,
    )


def reference_forward(obs, p):
    """Pure-JAX reference of ActorCritic.forward."""
    h = jnp.tanh(obs @ p["w1a"] + p["b1a"])
    h = jnp.tanh(h @ p["w2a"] + p["b2a"])
    mean = h @ p["wm"] + p["bm"]
    std = jnp.exp(p["log_std"])
    c = jnp.tanh(obs @ p["w1c"] + p["b1c"])
    c = jnp.tanh(c @ p["w2c"] + p["b2c"])
    value = c @ p["wv"] + p["bv"]
    return mean, std, value


if __name__ == "__main__":
    # Small shapes consistent with the module: obs_dim=24, action_dim=8, hidden=(32, 32)
    B, OBS_DIM, ACTION_DIM = 8, 24, 8
    HIDDEN = (32, 32)

    key = jax.random.PRNGKey(0)
    k_obs, k_params = jax.random.split(key)
    obs = jax.random.normal(k_obs, (B, OBS_DIM), jnp.float32)
    params = init_params(k_params, OBS_DIM, ACTION_DIM, HIDDEN)
    mean_r, std_r, value_r = reference_forward(obs, params)

    # --- f32-operand path (v5e fallback; tight numerics) ---------------------
    fwd_f32 = make_actor_critic_forward(params, OBS_DIM, ACTION_DIM, HIDDEN,
                                        compute_dtype=jnp.float32)
    mean32, std32, value32 = fwd_f32(obs)
    jax.block_until_ready((mean32, std32, value32))
    assert mean32.shape == (B, ACTION_DIM) and value32.shape == (B, 1)
    assert jnp.allclose(mean32, mean_r, atol=1e-4, rtol=1e-4), "f32 action_mean mismatch"
    assert jnp.allclose(std32, std_r, atol=1e-6), "f32 action_std mismatch"
    assert jnp.allclose(value32, value_r, atol=1e-4, rtol=1e-4), "f32 value mismatch"

    # --- bf16-operand path (default; v6e/v7x MXU rate, f32 accumulation) -----
    fwd_bf16 = make_actor_critic_forward(params, OBS_DIM, ACTION_DIM, HIDDEN,
                                         compute_dtype=jnp.bfloat16)
    mean16, std16, value16 = fwd_bf16(obs)
    jax.block_until_ready((mean16, std16, value16))
    assert mean16.shape == (B, ACTION_DIM) and value16.shape == (B, 1)
    assert jnp.allclose(mean16, mean_r, atol=2e-2, rtol=2e-2), "bf16 action_mean mismatch"
    assert jnp.allclose(std16, std_r, atol=1e-6), "bf16 action_std mismatch"
    assert jnp.allclose(value16, value_r, atol=2e-2, rtol=2e-2), "bf16 value mismatch"

    # TODO(synk): Normal sampling / log_prob / entropy (get_action, evaluate_actions)
    # are distribution-object ops; they are computed in plain JAX from (mean, std)
    # and are not part of the fused forward() hot path.

    print("KERNEL_OK")
</pallas_src>

<mosaic_0001>
module attributes {stable_mosaic.version = 11 : i64} {
  func.func @actor_critic_kernel(%arg0: i32, %arg1: memref<8x24xf32, #tpu.memory_space<vmem>>, %arg2: memref<3x128x128xf32, #tpu.memory_space<vmem>>, %arg3: memref<8x128xf32, #tpu.memory_space<vmem>>, %arg4: memref<8x128xf32, #tpu.memory_space<vmem>>) attributes {dimension_semantics = [#tpu.dimension_semantics<parallel>], iteration_bounds = array<i64: 1>, scalar_prefetch = 0 : i64, scratch_operands = 0 : i64, tpu.core_type = #tpu.core_type<tc>, window_params = [{transform_indices = @transform_0, window_bounds = array<i64: 8, 24>}, {pipeline_mode = #tpu.pipeline_mode<synchronous>, transform_indices = @transform_1, window_bounds = array<i64: 3, 128, 128>}, {pipeline_mode = #tpu.pipeline_mode<synchronous>, transform_indices = @transform_2, window_bounds = array<i64: 8, 128>}, {transform_indices = @transform_3, window_bounds = array<i64: 8, 128>}]} {
    %c0 = arith.constant 0 : index
    %c0_0 = arith.constant 0 : index
    %0 = vector.load %arg1[%c0, %c0_0] : memref<8x24xf32, #tpu.memory_space<vmem>>, vector<8x24xf32>
    %cst = arith.constant 0.000000e+00 : f32
    %1 = vector.broadcast %cst : f32 to vector<8x104xf32>
    %2 = tpu.concatenate %0, %1 in 1 : vector<8x24xf32>, vector<8x104xf32> -> vector<8x128xf32>
    %c0_1 = arith.constant 0 : index
    %c0_2 = arith.constant 0 : index
    %c0_3 = arith.constant 0 : index
    %3 = vector.load %arg2[%c0_1, %c0_2, %c0_3] : memref<3x128x128xf32, #tpu.memory_space<vmem>>, vector<1x128x128xf32>
    %4 = vector.shape_cast %3 : vector<1x128x128xf32> to vector<128x128xf32>
    %cst_4 = arith.constant dense<0.000000e+00> : vector<8x128xf32>
    %5 = tpu.matmul %2, %4, %cst_4 {dimension_numbers = #tpu.dot_dimension_numbers<[1], [0], [0], [1], [0, 0, 1, 1], [], []>} : vector<8x128xf32>, vector<128x128xf32>, vector<8x128xf32> -> vector<8x128xf32>
    %c0_5 = arith.constant 0 : index
    %c0_6 = arith.constant 0 : index
    %6 = vector.load %arg3[%c0_5, %c0_6] : memref<8x128xf32, #tpu.memory_space<vmem>>, vector<1x128xf32>
    %7 = vector.broadcast %6 : vector<1x128xf32> to vector<8x128xf32>
    %8 = arith.addf %5, %7 : vector<8x128xf32>
    %9 = math.tanh %8 : vector<8x128xf32>
    %c1 = arith.constant 1 : index
    %c0_7 = arith.constant 0 : index
    %c0_8 = arith.constant 0 : index
    %10 = vector.load %arg2[%c1, %c0_7, %c0_8] : memref<3x128x128xf32, #tpu.memory_space<vmem>>, vector<1x128x128xf32>
    %11 = vector.shape_cast %10 : vector<1x128x128xf32> to vector<128x128xf32>
    %cst_9 = arith.constant dense<0.000000e+00> : vector<8x128xf32>
    %12 = tpu.matmul %9, %11, %cst_9 {dimension_numbers = #tpu.dot_dimension_numbers<[1], [0], [0], [1], [0, 0, 1, 1], [], []>} : vector<8x128xf32>, vector<128x128xf32>, vector<8x128xf32> -> vector<8x128xf32>
    %c1_10 = arith.constant 1 : index
    %c0_11 = arith.constant 0 : index
    %13 = vector.load %arg3[%c1_10, %c0_11] : memref<8x128xf32, #tpu.memory_space<vmem>>, vector<1x128xf32>
    %14 = vector.broadcast %13 : vector<1x128xf32> to vector<8x128xf32>
    %15 = arith.addf %12, %14 : vector<8x128xf32>
    %16 = math.tanh %15 : vector<8x128xf32>
    %c2 = arith.constant 2 : index
    %c0_12 = arith.constant 0 : index
    %c0_13 = arith.constant 0 : index
    %17 = vector.load %arg2[%c2, %c0_12, %c0_13] : memref<3x128x128xf32, #tpu.memory_space<vmem>>, vector<1x128x128xf32>
    %18 = vector.shape_cast %17 : vector<1x128x128xf32> to vector<128x128xf32>
    %cst_14 = arith.constant dense<0.000000e+00> : vector<8x128xf32>
    %19 = tpu.matmul %16, %18, %cst_14 {dimension_numbers = #tpu.dot_dimension_numbers<[1], [0], [0], [1], [0, 0, 1, 1], [], []>} : vector<8x128xf32>, vector<128x128xf32>, vector<8x128xf32> -> vector<8x128xf32>
    %c2_15 = arith.constant 2 : index
    %c0_16 = arith.constant 0 : index
    %20 = vector.load %arg3[%c2_15, %c0_16] : memref<8x128xf32, #tpu.memory_space<vmem>>, vector<1x128xf32>
    %21 = vector.broadcast %20 : vector<1x128xf32> to vector<8x128xf32>
    %22 = arith.addf %19, %21 : vector<8x128xf32>
    %c0_17 = arith.constant 0 : index
    %c0_18 = arith.constant 0 : index
    %23 = vector.load %arg4[%c0_17, %c0_18] : memref<8x128xf32, #tpu.memory_space<vmem>>, vector<8x128xf32>
    tpu.vector_store %arg4[%c0_17, %c0_18], %22 {strides = array<i32>} : memref<8x128xf32, #tpu.memory_space<vmem>>, vector<8x128xf32>,
    return
  }
  func.func @transform_0(%arg0: i32) -> (i32, i32) {
    %c0_i32 = arith.constant 0 : i32
    %c0_i32_0 = arith.constant 0 : i32
    return %arg0, %c0_i32 : i32, i32
  }
  func.func @transform_1(%arg0: i32) -> (i32, i32, i32) {
    %c0_i32 = arith.constant 0 : i32
    %c0_i32_0 = arith.constant 0 : i32
    %c0_i32_1 = arith.constant 0 : i32
    %c0_i32_2 = arith.constant 0 : i32
    return %c0_i32, %c0_i32_0, %c0_i32_1 : i32, i32, i32
  }
  func.func @transform_2(%arg0: i32) -> (i32, i32) {
    %c0_i32 = arith.constant 0 : i32
    %c0_i32_0 = arith.constant 0 : i32
    %c0_i32_1 = arith.constant 0 : i32
    return %c0_i32, %c0_i32_0 : i32, i32
  }
  func.func @transform_3(%arg0: i32) -> (i32, i32) {
    %c0_i32 = arith.constant 0 : i32
    %c0_i32_0 = arith.constant 0 : i32
    return %arg0, %c0_i32 : i32, i32
  }
}

</mosaic_0001>

<llo_original>
// kernel: _forward_packed.1
$region0: #{_forward_packed.1}
  #allocation0 [shape = 'u32[]', space=smem, size = 0x4, offset = 0x4, fixed_abs, tag = 'smem constant byte address 0x4 - core index']
  #allocation1 [shape = 'u32[144,128]{1,0:T(1,128)}', space=vmem, size = 0x12000, scoped, tag = 'internal scratch']
  %s0 = inlined_call_operand.hbm [shape: f32[8,24], index: 0, kind: input, shape index: {}]
  %s1 = inlined_call_operand.hbm [shape: f32[3,128,128], index: 1, kind: input, shape index: {}]
  %s2 = inlined_call_operand.vmem [shape: f32[8,128], index: 2, kind: input, shape index: {}]
  %s3 = inlined_call_operand.vmem [shape: f32[8,128], index: 3, kind: output, shape index: {}]
  %s4 = sld [smem:[#allocation0]]
  $region30: #{_forward_packed.1} parent=0
    _
  %s6 = ssub.s32 1, %s4
  %s7 = scalar_select 0, %s6, %s4
  $region1: #{_forward_packed.1} parent=0
    #allocation2 [shape = 'u8[4096]{0}', space=vmem, size = 0x1000, scoped, tag = 'input window, operand 0, single buffered']
    #allocation3 [shape = 's32[1]{0}', space=sflag, size = 0x4, scoped, tag = 'scoped memory for _forward_packed.1']
    #allocation4 [shape = 'u8[196608]{0}', space=vmem, size = 0x30000, scoped, tag = 'input window, operand 1, single buffered']
    #allocation5 [shape = 's32[1]{0}', space=sflag, size = 0x4, scoped, tag = 'scoped memory for _forward_packed.1']
    %8 = vsyncpa [#allocation3], 0
    %9 = vsyncpa [#allocation5], 0
    // Predicated region
    $region2: #{_forward_packed.1} parent=1 // pred_check
      _
    $region3: #{_forward_packed.1} parent=1 // pred_check_branch
      %11 = sbr.rel (0) target = $region5
    $region4: #{_forward_packed.1} parent=1 // pred_region
      %s13 = ssub.s32 128, 128
      %14 = vsyncadd [#allocation3], %s13
      %s16 = sshll.u32 [#allocation2], 4
      %s17 = int_to_ptr.vmem [resolvable:$true] %s16
      %19 = dma.hbm_to_vmem [thread:$0]  %s0, 128, %s17, [#allocation3]
    $region5: #{_forward_packed.1} parent=1 // pred_fallthru
      _
    // Predicated region
    $region6: #{_forward_packed.1} parent=1 // pred_check
      _
    $region7: #{_forward_packed.1} parent=1 // pred_check_branch
      %21 = sbr.rel (0) target = $region9
    $region8: #{_forward_packed.1} parent=1 // pred_region
      %s23 = ssub.s32 6144, 6144
      %24 = vsyncadd [#allocation5], %s23
      %s25 = sshll.u32 [#allocation4], 4
      %s26 = int_to_ptr.vmem [resolvable:$true] %s25
      %31 = dma.hbm_to_vmem [thread:$0]  %s1, 6144, %s26, [#allocation5], 128, 128, 8
    $region9: #{_forward_packed.1} parent=1 // pred_fallthru
      _
    // Predicated region
    $region10: #{_forward_packed.1} parent=1 // pred_check
      _
    $region11: #{_forward_packed.1} parent=1 // pred_check_branch
      %33 = sbr.rel (0) target = $region13
    $region12: #{_forward_packed.1} parent=1 // pred_region
      _
    $region13: #{_forward_packed.1} parent=1 // pred_fallthru
      _
    // Predicated region
    $region14: #{_forward_packed.1} parent=1 // pred_check
      _
    $region15: #{_forward_packed.1} parent=1 // pred_check_branch
      %35 = sbr.rel (0) target = $region17
    $region16: #{_forward_packed.1} parent=1 // pred_region
      %36 = dma.done [#allocation3], 128
    $region17: #{_forward_packed.1} parent=1 // pred_fallthru
      _
    // Predicated region
    $region18: #{_forward_packed.1} parent=1 // pred_check
      _
    $region19: #{_forward_packed.1} parent=1 // pred_check_branch
      %38 = sbr.rel (0) target = $region21
    $region20: #{_forward_packed.1} parent=1 // pred_region
      %39 = dma.done [#allocation5], 6144
    $region21: #{_forward_packed.1} parent=1 // pred_fallthru
      _
    %v40 = vld [vmem:[#allocation2] sm:$0xff]
    %vm41 = vcmask 195584
    %v42 = vsel %vm41, %v40, 0.0
    %v43 = vld [vmem:[#allocation4] sm:$0xff]
    %v44 = vld [vmem:[#allocation4 + $0x8] sm:$0xff]
    %v45 = vld [vmem:[#allocation4 + $0x10] sm:$0xff]
    %v46 = vld [vmem:[#allocation4 + $0x18] sm:$0xff]
    %v47 = vld [vmem:[#allocation4 + $0x20] sm:$0xff]
    %v48 = vld [vmem:[#allocation4 + $0x28] sm:$0xff]
    %v49 = vld [vmem:[#allocation4 + $0x30] sm:$0xff]
    %v50 = vld [vmem:[#allocation4 + $0x38] sm:$0xff]
    %v51 = vld [vmem:[#allocation4 + $0x40] sm:$0xff]
    %v52 = vld [vmem:[#allocation4 + $0x48] sm:$0xff]
    %v53 = vld [vmem:[#allocation4 + $0x50] sm:$0xff]
    %v54 = vld [vmem:[#allocation4 + $0x58] sm:$0xff]
    %v55 = vld [vmem:[#allocation4 + $0x60] sm:$0xff]
    %v56 = vld [vmem:[#allocation4 + $0x68] sm:$0xff]
    %v57 = vld [vmem:[#allocation4 + $0x70] sm:$0xff]
    %v58 = vld [vmem:[#allocation4 + $0x78] sm:$0xff]
    %v59 = vld [vmem:[%s2] sm:$0x1]
    %v60 = vlaneseq
    %v61 = vshrl.u32 %v60, 7
    %v62 = vsub.s32 0, %v61
    %v63 = vrot.slane %v59, %v62
    %64 = vmatprep.subr.mxu0 0.0
    %65 = vmatpush1.msra.mxu0 %v43
    %66 = vmatprep.subr.mxu0 0.0
    %67 = vmatpush1.msra.mxu0 %v44
    %68 = vmatprep.subr.mxu0 0.0
    %69 = vmatpush1.msra.mxu0 %v45
    %70 = vmatprep.subr.mxu0 0.0
    %71 = vmatpush1.msra.mxu0 %v46
    %72 = vmatprep.subr.mxu0 0.0
    %73 = vmatpush1.msra.mxu0 %v47
    %74 = vmatprep.subr.mxu0 0.0
    %75 = vmatpush1.msra.mxu0 %v48
    %76 = vmatprep.subr.mxu0 0.0
    %77 = vmatpush1.msra.mxu0 %v49
    %78 = vmatprep.subr.mxu0 0.0
    %79 = vmatpush1.msra.mxu0 %v50
    %80 = vmatprep.subr.mxu0 0.0
    %81 = vmatpush1.msra.mxu0 %v51
    %82 = vmatprep.subr.mxu0 0.0
    %83 = vmatpush1.msra.mxu0 %v52
    %84 = vmatprep.subr.mxu0 0.0
    %85 = vmatpush1.msra.mxu0 %v53
    %86 = vmatprep.subr.mxu0 0.0
    %87 = vmatpush1.msra.mxu0 %v54
    %88 = vmatprep.subr.mxu0 0.0
    %89 = vmatpush1.msra.mxu0 %v55
    %90 = vmatprep.subr.mxu0 0.0
    %91 = vmatpush1.msra.mxu0 %v56
    %92 = vmatprep.subr.mxu0 0.0
    %93 = vmatpush1.msra.mxu0 %v57
    %94 = vmatprep.subr.mxu0 0.0
    %95 = vmatpush1.msra.mxu0 %v58
    %96 = vmatprep.subr.mxu0 0.0
    %97 = vmatpush1.msra.mxu0 0.0
    %98 = vmatprep.subr.mxu0 0.0
    %99 = vmatpush1.msra.mxu0 0.0
    %100 = vmatprep.subr.mxu0 0.0
    %101 = vmatpush1.msra.mxu0 0.0
    %102 = vmatprep.subr.mxu0 0.0
    %103 = vmatpush1.msra.mxu0 0.0
    %104 = vmatprep.subr.mxu0 0.0
    %105 = vmatpush1.msra.mxu0 0.0
    %106 = vmatprep.subr.mxu0 0.0
    %107 = vmatpush1.msra.mxu0 0.0
    %108 = vmatprep.subr.mxu0 0.0
    %109 = vmatpush1.msra.mxu0 0.0
    %110 = vmatprep.subr.mxu0 0.0
    %111 = vmatpush1.msra.mxu0 0.0
    %112 = vmatprep.subr.mxu0 0.0
    %113 = vmatpush1.msra.mxu0 0.0
    %114 = vmatprep.subr.mxu0 0.0
    %115 = vmatpush1.msra.mxu0 0.0
    %116 = vmatprep.subr.mxu0 0.0
    %117 = vmatpush1.msra.mxu0 0.0
    %118 = vmatprep.subr.mxu0 0.0
    %119 = vmatpush1.msra.mxu0 0.0
    %120 = vmatprep.subr.mxu0 0.0
    %121 = vmatpush1.msra.mxu0 0.0
    %122 = vmatprep.subr.mxu0 0.0
    %123 = vmatpush1.msra.mxu0 0.0
    %124 = vmatprep.subr.mxu0 0.0
    %125 = vmatpush1.msra.mxu0 0.0
    %126 = vmatprep.subr.mxu0 0.0
    %127 = vmatpush1.msra.mxu0 0.0
    %128 = vmatprep.mubr.f32.mxu0 0.0
    %129 = vmatmul.mubr.f32.gmra.mrb[0].mxu0 %v42
    %v130 = vpop.f32.mrb[0].mxu0
    %v131 = vadd.f32 %v63, %v130
    %v132 = vpop.f32.mrb[0].mxu0
    %133 = vdwg.mxu0
    %v134 = vtanh.pop %v131
    %s135 = scalar_lea.vmem [#allocation4], 128
    %v136 = vld [vmem:[%s135] sm:$0xff]
    %v137 = vld [vmem:[%s135 + $0x8] sm:$0xff]
    %v138 = vld [vmem:[%s135 + $0x10] sm:$0xff]
    %v139 = vld [vmem:[%s135 + $0x18] sm:$0xff]
    %v140 = vld [vmem:[%s135 + $0x20] sm:$0xff]
    %v141 = vld [vmem:[%s135 + $0x28] sm:$0xff]
    %v142 = vld [vmem:[%s135 + $0x30] sm:$0xff]
    %v143 = vld [vmem:[%s135 + $0x38] sm:$0xff]
    %v144 = vld [vmem:[%s135 + $0x40] sm:$0xff]
    %v145 = vld [vmem:[%s135 + $0x48] sm:$0xff]
    %v146 = vld [vmem:[%s135 + $0x50] sm:$0xff]
    %v147 = vld [vmem:[%s135 + $0x58] sm:$0xff]
    %v148 = vld [vmem:[%s135 + $0x60] sm:$0xff]
    %v149 = vld [vmem:[%s135 + $0x68] sm:$0xff]
    %v150 = vld [vmem:[%s135 + $0x70] sm:$0xff]
    %v151 = vld [vmem:[%s135 + $0x78] sm:$0xff]
    %v152 = vld [vmem:[%s2 + $0x1] sm:$0x1]
    %v153 = vlaneseq
    %v154 = vshrl.u32 %v153, 7
    %v155 = vsub.s32 0, %v154
    %v156 = vrot.slane %v152, %v155
    %157 = vmatprep.subr.mxu0 0.0
    %158 = vmatpush1.msra.mxu0 %v136
    %159 = vmatprep.subr.mxu0 0.0
    %160 = vmatpush1.msra.mxu0 %v137
    %161 = vmatprep.subr.mxu0 0.0
    %162 = vmatpush1.msra.mxu0 %v138
    %163 = vmatprep.subr.mxu0 0.0
    %164 = vmatpush1.msra.mxu0 %v139
    %165 = vmatprep.subr.mxu0 0.0
    %166 = vmatpush1.msra.mxu0 %v140
    %167 = vmatprep.subr.mxu0 0.0
    %168 = vmatpush1.msra.mxu0 %v141
    %169 = vmatprep.subr.mxu0 0.0
    %170 = vmatpush1.msra.mxu0 %v142
    %171 = vmatprep.subr.mxu0 0.0
    %172 = vmatpush1.msra.mxu0 %v143
    %173 = vmatprep.subr.mxu0 0.0
    %174 = vmatpush1.msra.mxu0 %v144
    %175 = vmatprep.subr.mxu0 0.0
    %176 = vmatpush1.msra.mxu0 %v145
    %177 = vmatprep.subr.mxu0 0.0
    %178 = vmatpush1.msra.mxu0 %v146
    %179 = vmatprep.subr.mxu0 0.0
    %180 = vmatpush1.msra.mxu0 %v147
    %181 = vmatprep.subr.mxu0 0.0
    %182 = vmatpush1.msra.mxu0 %v148
    %183 = vmatprep.subr.mxu0 0.0
    %184 = vmatpush1.msra.mxu0 %v149
    %185 = vmatprep.subr.mxu0 0.0
    %186 = vmatpush1.msra.mxu0 %v150
    %187 = vmatprep.subr.mxu0 0.0
    %188 = vmatpush1.msra.mxu0 %v151
    %189 = vmatprep.subr.mxu0 0.0
    %190 = vmatpush1.msra.mxu0 0.0
    %191 = vmatprep.subr.mxu0 0.0
    %192 = vmatpush1.msra.mxu0 0.0
    %193 = vmatprep.subr.mxu0 0.0
    %194 = vmatpush1.msra.mxu0 0.0
    %195 = vmatprep.subr.mxu0 0.0
    %196 = vmatpush1.msra.mxu0 0.0
    %197 = vmatprep.subr.mxu0 0.0
    %198 = vmatpush1.msra.mxu0 0.0
    %199 = vmatprep.subr.mxu0 0.0
    %200 = vmatpush1.msra.mxu0 0.0
    %201 = vmatprep.subr.mxu0 0.0
    %202 = vmatpush1.msra.mxu0 0.0
    %203 = vmatprep.subr.mxu0 0.0
    %204 = vmatpush1.msra.mxu0 0.0
    %205 = vmatprep.subr.mxu0 0.0
    %206 = vmatpush1.msra.mxu0 0.0
    %207 = vmatprep.subr.mxu0 0.0
    %208 = vmatpush1.msra.mxu0 0.0
    %209 = vmatprep.subr.mxu0 0.0
    %210 = vmatpush1.msra.mxu0 0.0
    %211 = vmatprep.subr.mxu0 0.0
    %212 = vmatpush1.msra.mxu0 0.0
    %213 = vmatprep.subr.mxu0 0.0
    %214 = vmatpush1.msra.mxu0 0.0
    %215 = vmatprep.subr.mxu0 0.0
    %216 = vmatpush1.msra.mxu0 0.0
    %217 = vmatprep.subr.mxu0 0.0
    %218 = vmatpush1.msra.mxu0 0.0
    %219 = vmatprep.subr.mxu0 0.0
    %220 = vmatpush1.msra.mxu0 0.0
    %221 = vmatprep.mubr.f32.mxu0 0.0
    %222 = vmatmul.mubr.f32.gmra.mrb[0].mxu0 %v134
    %v223 = vpop.f32.mrb[0].mxu0
    %v224 = vadd.f32 %v156, %v223
    %v225 = vpop.f32.mrb[0].mxu0
    %226 = vdwg.mxu0
    %v227 = vtanh.pop %v224
    %s228 = scalar_lea.vmem [#allocation4], 256
    %v229 = vld [vmem:[%s228] sm:$0xff]
    %v230 = vld [vmem:[%s228 + $0x8] sm:$0xff]
    %v231 = vld [vmem:[%s228 + $0x10] sm:$0xff]
    %v232 = vld [vmem:[%s228 + $0x18] sm:$0xff]
    %v233 = vld [vmem:[%s228 + $0x20] sm:$0xff]
    %v234 = vld [vmem:[%s228 + $0x28] sm:$0xff]
    %v235 = vld [vmem:[%s228 + $0x30] sm:$0xff]
    %v236 = vld [vmem:[%s228 + $0x38] sm:$0xff]
    %v237 = vld [vmem:[%s228 + $0x40] sm:$0xff]
    %v238 = vld [vmem:[%s228 + $0x48] sm:$0xff]
    %v239 = vld [vmem:[%s228 + $0x50] sm:$0xff]
    %v240 = vld [vmem:[%s228 + $0x58] sm:$0xff]
    %v241 = vld [vmem:[%s228 + $0x60] sm:$0xff]
    %v242 = vld [vmem:[%s228 + $0x68] sm:$0xff]
    %v243 = vld [vmem:[%s228 + $0x70] sm:$0xff]
    %v244 = vld [vmem:[%s228 + $0x78] sm:$0xff]
    %v245 = vld [vmem:[%s2 + $0x2] sm:$0x1]
    %v246 = vlaneseq
    %v247 = vshrl.u32 %v246, 7
    %v248 = vsub.s32 0, %v247
    %v249 = vrot.slane %v245, %v248
    %250 = vmatprep.subr.mxu0 0.0
    %251 = vmatpush1.msra.mxu0 %v229
    %252 = vmatprep.subr.mxu0 0.0
    %253 = vmatpush1.msra.mxu0 %v230
    %254 = vmatprep.subr.mxu0 0.0
    %255 = vmatpush1.msra.mxu0 %v231
    %256 = vmatprep.subr.mxu0 0.0
    %257 = vmatpush1.msra.mxu0 %v232
    %258 = vmatprep.subr.mxu0 0.0
    %259 = vmatpush1.msra.mxu0 %v233
    %260 = vmatprep.subr.mxu0 0.0
    %261 = vmatpush1.msra.mxu0 %v234
    %262 = vmatprep.subr.mxu0 0.0
    %263 = vmatpush1.msra.mxu0 %v235
    %264 = vmatprep.subr.mxu0 0.0
    %265 = vmatpush1.msra.mxu0 %v236
    %266 = vmatprep.subr.mxu0 0.0
    %267 = vmatpush1.msra.mxu0 %v237
    %268 = vmatprep.subr.mxu0 0.0
    %269 = vmatpush1.msra.mxu0 %v238
    %270 = vmatprep.subr.mxu0 0.0
    %271 = vmatpush1.msra.mxu0 %v239
    %272 = vmatprep.subr.mxu0 0.0
    %273 = vmatpush1.msra.mxu0 %v240
    %274 = vmatprep.subr.mxu0 0.0
    %275 = vmatpush1.msra.mxu0 %v241
    %276 = vmatprep.subr.mxu0 0.0
    %277 = vmatpush1.msra.mxu0 %v242
    %278 = vmatprep.subr.mxu0 0.0
    %279 = vmatpush1.msra.mxu0 %v243
    %280 = vmatprep.subr.mxu0 0.0
    %281 = vmatpush1.msra.mxu0 %v244
    %282 = vmatprep.subr.mxu0 0.0
    %283 = vmatpush1.msra.mxu0 0.0
    %284 = vmatprep.subr.mxu0 0.0
    %285 = vmatpush1.msra.mxu0 0.0
    %286 = vmatprep.subr.mxu0 0.0
    %287 = vmatpush1.msra.mxu0 0.0
    %288 = vmatprep.subr.mxu0 0.0
    %289 = vmatpush1.msra.mxu0 0.0
    %290 = vmatprep.subr.mxu0 0.0
    %291 = vmatpush1.msra.mxu0 0.0
    %292 = vmatprep.subr.mxu0 0.0
    %293 = vmatpush1.msra.mxu0 0.0
    %294 = vmatprep.subr.mxu0 0.0
    %295 = vmatpush1.msra.mxu0 0.0
    %296 = vmatprep.subr.mxu0 0.0
    %297 = vmatpush1.msra.mxu0 0.0
    %298 = vmatprep.subr.mxu0 0.0
    %299 = vmatpush1.msra.mxu0 0.0
    %300 = vmatprep.subr.mxu0 0.0
    %301 = vmatpush1.msra.mxu0 0.0
    %302 = vmatprep.subr.mxu0 0.0
    %303 = vmatpush1.msra.mxu0 0.0
    %304 = vmatprep.subr.mxu0 0.0
    %305 = vmatpush1.msra.mxu0 0.0
    %306 = vmatprep.subr.mxu0 0.0
    %307 = vmatpush1.msra.mxu0 0.0
    %308 = vmatprep.subr.mxu0 0.0
    %309 = vmatpush1.msra.mxu0 0.0
    %310 = vmatprep.subr.mxu0 0.0
    %311 = vmatpush1.msra.mxu0 0.0
    %312 = vmatprep.subr.mxu0 0.0
    %313 = vmatpush1.msra.mxu0 0.0
    %314 = vmatprep.mubr.f32.mxu0 0.0
    %315 = vmatmul.mubr.f32.gmra.mrb[0].mxu0 %v227
    %v316 = vpop.f32.mrb[0].mxu0
    %v317 = vadd.f32 %v249, %v316
    %v318 = vpop.f32.mrb[0].mxu0
    %319 = vdwg.mxu0
    %320 = vst [vmem:[%s3] sm:$0xff] %v317
    // Predicated region
    $region22: #{_forward_packed.1} parent=1 // pred_check
      _
    $region23: #{_forward_packed.1} parent=1 // pred_check_branch
      %322 = sbr.rel (0) target = $region25
    $region24: #{_forward_packed.1} parent=1 // pred_region
      _
    $region25: #{_forward_packed.1} parent=1 // pred_fallthru
      _
    // Predicated region
    $region26: #{_forward_packed.1} parent=1 // pred_check
      _
    $region27: #{_forward_packed.1} parent=1 // pred_check_branch
      %324 = sbr.rel (0) target = $region29
    $region28: #{_forward_packed.1} parent=1 // pred_region
      _
    $region29: #{_forward_packed.1} parent=1 // pred_fallthru
      _
    %325 = vsyncpa [#allocation3], 1
    %326 = vsyncpa [#allocation5], 1

</llo_original>
